<compile_context>
chip_gen: v6e
topology: v6e:2x2x1
jax: 0.10.0
libtpu: 0.0.40
codegen_flags: <defaults>
</compile_context>

<pallas_src>
import jax
import jax.numpy as jnp
from jax import lax
from jax.experimental import pallas as pl
from jax.experimental.pallas import tpu as pltpu

_LANE = 128
_VMEM_LIMIT = 48 * 1024 * 1024  # fits v5e/v6e (128 MiB) and v7x (64 MiB) physical VMEM
_EPS = 1e-5
_NEG_SLOPE = 0.1


def _round_up(x, m):
    return ((x + m - 1) // m) * m


# ---------------------------------------------------------------------------
# Kernel A: one row-tile of  H = (A_tile @ X) @ W  plus per-tile BN partial sums.
#   a_ref : (TM, N_pad)  bf16   (streamed, pipelined per grid step)
#   x_ref : (N_pad, PIN) bf16   (resident)
#   w_ref : (PIN, POUT)  bf16   (resident)  -- bias folded into last used row
# ---------------------------------------------------------------------------
def gcn_agg_kernel(a_ref, x_ref, w_ref, h_ref, s_ref, q_ref):
    ax = jnp.dot(a_ref[...], x_ref[...], preferred_element_type=jnp.float32)
    h = jnp.dot(ax.astype(jnp.bfloat16), w_ref[...],
                preferred_element_type=jnp.float32)
    h_ref[...] = h
    # Per-tile partial BatchNorm statistics (padded rows of A are zero, so
    # padded nodes contribute exactly 0).  Broadcast to an (8, POUT) block to
    # keep the output sublane-aligned.
    s_ref[...] = jnp.broadcast_to(jnp.sum(h, axis=0, keepdims=True), s_ref.shape)
    q_ref[...] = jnp.broadcast_to(jnp.sum(h * h, axis=0, keepdims=True), q_ref.shape)


# ---------------------------------------------------------------------------
# Kernel B: elementwise BatchNorm-affine + LeakyReLU(0.1) (+ optional ones
# column injected via `add_ref`, used to build the augmented layer-2 input).
# ---------------------------------------------------------------------------
def bn_act_kernel(h_ref, scale_ref, shift_ref, add_ref, o_ref):
    y = h_ref[...] * scale_ref[...] + shift_ref[...]
    y = jnp.where(y > 0, y, _NEG_SLOPE * y)
    o_ref[...] = (y + add_ref[...]).astype(o_ref.dtype)


# ---------------------------------------------------------------------------
# pallas_call wrappers
# ---------------------------------------------------------------------------
def _agg_call(a_bf16, x_bf16, w_bf16, tm):
    n_pad = a_bf16.shape[0]
    t = n_pad // tm
    pin = x_bf16.shape[1]
    pout = w_bf16.shape[1]
    h, s, q = pl.pallas_call(
        gcn_agg_kernel,
        out_shape=(
            jax.ShapeDtypeStruct((n_pad, pout), jnp.float32),
            jax.ShapeDtypeStruct((8 * t, pout), jnp.float32),
            jax.ShapeDtypeStruct((8 * t, pout), jnp.float32),
        ),
        grid=(t,),
        in_specs=[
            pl.BlockSpec((tm, n_pad), lambda i: (i, 0)),     # A row tile (streamed)
            pl.BlockSpec((n_pad, pin), lambda i: (0, 0)),    # X resident
            pl.BlockSpec((pin, pout), lambda i: (0, 0)),     # W resident
        ],
        out_specs=(
            pl.BlockSpec((tm, pout), lambda i: (i, 0)),
            pl.BlockSpec((8, pout), lambda i: (i, 0)),
            pl.BlockSpec((8, pout), lambda i: (i, 0)),
        ),
        compiler_params=pltpu.CompilerParams(
            dimension_semantics=("parallel",),
            vmem_limit_bytes=_VMEM_LIMIT,
        ),
    )(a_bf16, x_bf16, w_bf16)
    # Tiny cross-tile combine (t entries) in glue; the heavy N-reduction was in-kernel.
    ssum = s.reshape(t, 8, pout)[:, 0, :].sum(axis=0)
    qsum = q.reshape(t, 8, pout)[:, 0, :].sum(axis=0)
    return h, ssum, qsum


def _bn_act_call(h, scale, shift, add_row, tm, out_dtype):
    n_pad, p = h.shape
    t = n_pad // tm
    return pl.pallas_call(
        bn_act_kernel,
        out_shape=jax.ShapeDtypeStruct((n_pad, p), out_dtype),
        grid=(t,),
        in_specs=[
            pl.BlockSpec((tm, p), lambda i: (i, 0)),
            pl.BlockSpec((1, p), lambda i: (0, 0)),
            pl.BlockSpec((1, p), lambda i: (0, 0)),
            pl.BlockSpec((1, p), lambda i: (0, 0)),
        ],
        out_specs=pl.BlockSpec((tm, p), lambda i: (i, 0)),
        compiler_params=pltpu.CompilerParams(
            dimension_semantics=("parallel",),
            vmem_limit_bytes=_VMEM_LIMIT,
        ),
    )(h, scale, shift, add_row)


def _bn_affine(ssum, qsum, gamma_pad, beta_pad, n_true):
    # Training-mode BatchNorm1d: batch mean, biased variance, eps=1e-5.
    mean = ssum / n_true
    var = jnp.maximum(qsum / n_true - mean * mean, 0.0)
    scale = gamma_pad * lax.rsqrt(var + _EPS)
    shift = beta_pad - mean * scale
    return scale.reshape(1, -1), shift.reshape(1, -1)


# ---------------------------------------------------------------------------
# Glue: GCN-normalized dense adjacency from edge_index (PyG GCNConv semantics)
# ---------------------------------------------------------------------------
def build_norm_adj(edge_index, num_nodes):
    src = edge_index[0]
    dst = edge_index[1]
    loops = jnp.arange(num_nodes, dtype=edge_index.dtype)
    row = jnp.concatenate([src, loops])          # j (source / x_j)
    col = jnp.concatenate([dst, loops])          # i (target / aggregation)
    deg = jnp.zeros((num_nodes,), jnp.float32).at[col].add(1.0)
    dinv = deg ** (-0.5)
    norm = dinv[row] * dinv[col]
    a_hat = jnp.zeros((num_nodes, num_nodes), jnp.float32).at[col, row].add(norm)
    return a_hat


def _pad_vec(v, p):
    return jnp.zeros((p,), jnp.float32).at[: v.shape[0]].set(v)


# ---------------------------------------------------------------------------
# Forward
# ---------------------------------------------------------------------------
def gcn_forward(x, edge_index, params, *, tile_rows=256):
    n, in_dim = x.shape
    hidden = params["w1"].shape[0]
    emb = params["w2"].shape[0]

    # Tiling: node dim padded to a multiple of a lane-dense row tile.
    # NOTE: re-derive `tile_rows` per generation if graphs get large
    # (v7x has 64 MiB VMEM vs 128 MiB on v5e/v6e).
    tm = min(tile_rows, _round_up(n, _LANE))
    n_pad = _round_up(n, tm)

    p1 = _round_up(in_dim + 1, _LANE)   # augmented input width (ones column)
    p2 = _round_up(hidden + 1, _LANE)   # hidden width (+ ones column for layer 2)
    p3 = _round_up(emb, _LANE)

    # Normalized adjacency, padded, bf16 (halves HBM traffic; BN renormalizes).
    a_hat = build_norm_adj(edge_index, n)
    a_pad = jnp.zeros((n_pad, n_pad), jnp.float32).at[:n, :n].set(a_hat)
    a_bf16 = a_pad.astype(jnp.bfloat16)

    # Augmented, lane-padded input: [x, 1, 0...]
    x_aug = jnp.zeros((n_pad, p1), jnp.float32)
    x_aug = x_aug.at[:n, :in_dim].set(x).at[:n, in_dim].set(1.0)
    x_aug = x_aug.astype(jnp.bfloat16)

    # Layer-1 augmented weight: rows [W1^T ; b1], lane-padded.
    w1_aug = jnp.zeros((p1, p2), jnp.float32)
    w1_aug = w1_aug.at[:in_dim, :hidden].set(params["w1"].T)
    w1_aug = w1_aug.at[in_dim, :hidden].set(params["b1"])
    w1_aug = w1_aug.astype(jnp.bfloat16)

    # Layer-2 augmented weight: rows [W2^T ; b2], lane-padded.
    w2_aug = jnp.zeros((p2, p3), jnp.float32)
    w2_aug = w2_aug.at[:hidden, :emb].set(params["w2"].T)
    w2_aug = w2_aug.at[hidden, :emb].set(params["b2"])
    w2_aug = w2_aug.astype(jnp.bfloat16)

    g1 = _pad_vec(params["gamma1"], p2)
    be1 = _pad_vec(params["beta1"], p2)
    g2 = _pad_vec(params["gamma2"], p3)
    be2 = _pad_vec(params["beta2"], p3)

    one_col = jnp.zeros((1, p2), jnp.float32).at[0, hidden].set(1.0)
    zero_col = jnp.zeros((1, p3), jnp.float32)

    # ---- Layer 1: h1 = A @ (x W1^T + b1), with in-kernel BN partial sums ----
    h1, s1, q1 = _agg_call(a_bf16, x_aug, w1_aug, tm)
    sc1, sh1 = _bn_affine(s1, q1, g1, be1, float(n))
    # BN + LeakyReLU + append ones column -> augmented layer-2 input (bf16).
    g_aug = _bn_act_call(h1, sc1, sh1, one_col, tm, jnp.bfloat16)

    # ---- Layer 2: h2 = A @ (g W2^T + b2) ----
    h2, s2, q2 = _agg_call(a_bf16, g_aug, w2_aug, tm)
    sc2, sh2 = _bn_affine(s2, q2, g2, be2, float(n))
    out = _bn_act_call(h2, sc2, sh2, zero_col, tm, jnp.float32)

    return out[:n, :emb]


# ---------------------------------------------------------------------------
# Deterministic parameter init (shapes from GCN.__init__)
# ---------------------------------------------------------------------------
def init_params(key, input_dim, hidden_dim, embedding_dim):
    k1, k2, k3, k4 = jax.random.split(key, 4)
    bound1 = 1.0 / (input_dim ** 0.5)
    bound2 = 1.0 / (hidden_dim ** 0.5)
    return {
        "w1": jax.random.uniform(k1, (hidden_dim, input_dim), jnp.float32,
                                 -bound1, bound1),
        "b1": jax.random.uniform(k2, (hidden_dim,), jnp.float32, -bound1, bound1),
        "w2": jax.random.uniform(k3, (embedding_dim, hidden_dim), jnp.float32,
                                 -bound2, bound2),
        "b2": jax.random.uniform(k4, (embedding_dim,), jnp.float32, -bound2, bound2),
        "gamma1": jnp.ones((hidden_dim,), jnp.float32),
        "beta1": jnp.zeros((hidden_dim,), jnp.float32),
        "gamma2": jnp.ones((embedding_dim,), jnp.float32),
        "beta2": jnp.zeros((embedding_dim,), jnp.float32),
    }


# ---------------------------------------------------------------------------
# Pure-JAX f32 reference (for a loose sanity check)
# ---------------------------------------------------------------------------
def gcn_reference(x, edge_index, params):
    a_hat = build_norm_adj(edge_index, x.shape[0])

    def layer(h, w, b, gamma, beta):
        h = a_hat @ (h @ w.T + b)
        mean = h.mean(axis=0, keepdims=True)
        var = ((h - mean) ** 2).mean(axis=0, keepdims=True)
        h = gamma * (h - mean) * lax.rsqrt(var + _EPS) + beta
        return jnp.where(h > 0, h, _NEG_SLOPE * h)

    h = layer(x, params["w1"], params["b1"], params["gamma1"], params["beta1"])
    return layer(h, params["w2"], params["b2"], params["gamma2"], params["beta2"])


if __name__ == "__main__":
    N = 16
    INPUT_DIM = 8
    HIDDEN_DIM = 32
    EMB_DIM = 16

    key = jax.random.PRNGKey(0)
    kx, kp, _ = jax.random.split(key, 3)

    x = jax.random.normal(kx, (N, INPUT_DIM), jnp.float32)

    # Deterministic small graph: ring edges (both directions) + a few extras.
    src = jnp.concatenate([jnp.arange(N), (jnp.arange(N) + 1) % N,
                           jnp.array([0, 3, 7, 2])])
    dst = jnp.concatenate([(jnp.arange(N) + 1) % N, jnp.arange(N),
                           jnp.array([8, 12, 1, 10])])
    edge_index = jnp.stack([src, dst]).astype(jnp.int32)   # (2, 36)

    params = init_params(kp, INPUT_DIM, HIDDEN_DIM, EMB_DIM)

    out = jax.jit(gcn_forward)(x, edge_index, params)
    jax.block_until_ready(out)
    assert out.shape == (N, EMB_DIM)

    # Loose tolerance: matmul operands are bf16 (f32 accumulation), BN renormalizes.
    ref = gcn_reference(x, edge_index, params)
    max_err = float(jnp.max(jnp.abs(out - ref)))
    assert max_err < 0.25, f"max abs error {max_err}"

    print("KERNEL_OK")
</pallas_src>

<mosaic_0001>
module attributes {stable_mosaic.version = 11 : i64} {
  func.func @gcn_agg_kernel(%arg0: i32, %arg1: memref<128x128xbf16, #tpu.memory_space<vmem>>, %arg2: memref<128x128xbf16, #tpu.memory_space<vmem>>, %arg3: memref<128x128xbf16, #tpu.memory_space<vmem>>, %arg4: memref<128x128xf32, #tpu.memory_space<vmem>>, %arg5: memref<8x128xf32, #tpu.memory_space<vmem>>, %arg6: memref<8x128xf32, #tpu.memory_space<vmem>>) attributes {dimension_semantics = [#tpu.dimension_semantics<parallel>], iteration_bounds = array<i64: 1>, scalar_prefetch = 0 : i64, scratch_operands = 0 : i64, tpu.core_type = #tpu.core_type<tc>, window_params = [{transform_indices = @transform_0, window_bounds = array<i64: 128, 128>}, {pipeline_mode = #tpu.pipeline_mode<synchronous>, transform_indices = @transform_1, window_bounds = array<i64: 128, 128>}, {pipeline_mode = #tpu.pipeline_mode<synchronous>, transform_indices = @transform_2, window_bounds = array<i64: 128, 128>}, {transform_indices = @transform_3, window_bounds = array<i64: 128, 128>}, {transform_indices = @transform_4, window_bounds = array<i64: 8, 128>}, {transform_indices = @transform_5, window_bounds = array<i64: 8, 128>}]} {
    %c0 = arith.constant 0 : index
    %c0_0 = arith.constant 0 : index
    %0 = vector.load %arg1[%c0, %c0_0] : memref<128x128xbf16, #tpu.memory_space<vmem>>, vector<128x128xbf16>
    %c0_1 = arith.constant 0 : index
    %c0_2 = arith.constant 0 : index
    %1 = vector.load %arg2[%c0_1, %c0_2] : memref<128x128xbf16, #tpu.memory_space<vmem>>, vector<128x128xbf16>
    %cst = arith.constant dense<0.000000e+00> : vector<128x128xf32>
    %2 = tpu.matmul %0, %1, %cst {dimension_numbers = #tpu.dot_dimension_numbers<[1], [0], [0], [1], [0, 0, 1, 1], [], []>} : vector<128x128xbf16>, vector<128x128xbf16>, vector<128x128xf32> -> vector<128x128xf32>
    %3 = arith.truncf %2 : vector<128x128xf32> to vector<128x128xbf16>
    %c0_3 = arith.constant 0 : index
    %c0_4 = arith.constant 0 : index
    %4 = vector.load %arg3[%c0_3, %c0_4] : memref<128x128xbf16, #tpu.memory_space<vmem>>, vector<128x128xbf16>
    %cst_5 = arith.constant dense<0.000000e+00> : vector<128x128xf32>
    %5 = tpu.matmul %3, %4, %cst_5 {dimension_numbers = #tpu.dot_dimension_numbers<[1], [0], [0], [1], [0, 0, 1, 1], [], []>} : vector<128x128xbf16>, vector<128x128xbf16>, vector<128x128xf32> -> vector<128x128xf32>
    %c0_6 = arith.constant 0 : index
    %c0_7 = arith.constant 0 : index
    %6 = vector.load %arg4[%c0_6, %c0_7] : memref<128x128xf32, #tpu.memory_space<vmem>>, vector<128x128xf32>
    tpu.vector_store %arg4[%c0_6, %c0_7], %5 {strides = array<i32>} : memref<128x128xf32, #tpu.memory_space<vmem>>, vector<128x128xf32>,
    %cst_8 = arith.constant dense<0.000000e+00> : vector<128xf32>
    %7 = vector.multi_reduction <add>, %5, %cst_8 [0] : vector<128x128xf32> to vector<128xf32>
    %8 = vector.shape_cast %7 : vector<128xf32> to vector<1x128xf32>
    %9 = vector.shape_cast %8 : vector<1x128xf32> to vector<1x128xf32>
    %10 = vector.broadcast %9 : vector<1x128xf32> to vector<8x128xf32>
    %c0_9 = arith.constant 0 : index
    %c0_10 = arith.constant 0 : index
    %11 = vector.load %arg5[%c0_9, %c0_10] : memref<8x128xf32, #tpu.memory_space<vmem>>, vector<8x128xf32>
    tpu.vector_store %arg5[%c0_9, %c0_10], %10 {strides = array<i32>} : memref<8x128xf32, #tpu.memory_space<vmem>>, vector<8x128xf32>,
    %12 = arith.mulf %5, %5 : vector<128x128xf32>
    %cst_11 = arith.constant dense<0.000000e+00> : vector<128xf32>
    %13 = vector.multi_reduction <add>, %12, %cst_11 [0] : vector<128x128xf32> to vector<128xf32>
    %14 = vector.shape_cast %13 : vector<128xf32> to vector<1x128xf32>
    %15 = vector.shape_cast %14 : vector<1x128xf32> to vector<1x128xf32>
    %16 = vector.broadcast %15 : vector<1x128xf32> to vector<8x128xf32>
    %c0_12 = arith.constant 0 : index
    %c0_13 = arith.constant 0 : index
    %17 = vector.load %arg6[%c0_12, %c0_13] : memref<8x128xf32, #tpu.memory_space<vmem>>, vector<8x128xf32>
    tpu.vector_store %arg6[%c0_12, %c0_13], %16 {strides = array<i32>} : memref<8x128xf32, #tpu.memory_space<vmem>>, vector<8x128xf32>,
    return
  }
  func.func @transform_0(%arg0: i32) -> (i32, i32) {
    %c0_i32 = arith.constant 0 : i32
    %c0_i32_0 = arith.constant 0 : i32
    return %arg0, %c0_i32 : i32, i32
  }
  func.func @transform_1(%arg0: i32) -> (i32, i32) {
    %c0_i32 = arith.constant 0 : i32
    %c0_i32_0 = arith.constant 0 : i32
    %c0_i32_1 = arith.constant 0 : i32
    return %c0_i32, %c0_i32_0 : i32, i32
  }
  func.func @transform_2(%arg0: i32) -> (i32, i32) {
    %c0_i32 = arith.constant 0 : i32
    %c0_i32_0 = arith.constant 0 : i32
    %c0_i32_1 = arith.constant 0 : i32
    return %c0_i32, %c0_i32_0 : i32, i32
  }
  func.func @transform_3(%arg0: i32) -> (i32, i32) {
    %c0_i32 = arith.constant 0 : i32
    %c0_i32_0 = arith.constant 0 : i32
    return %arg0, %c0_i32 : i32, i32
  }
  func.func @transform_4(%arg0: i32) -> (i32, i32) {
    %c0_i32 = arith.constant 0 : i32
    %c0_i32_0 = arith.constant 0 : i32
    return %arg0, %c0_i32 : i32, i32
  }
  func.func @transform_5(%arg0: i32) -> (i32, i32) {
    %c0_i32 = arith.constant 0 : i32
    %c0_i32_0 = arith.constant 0 : i32
    return %arg0, %c0_i32 : i32, i32
  }
}

module attributes {stable_mosaic.version = 11 : i64} {
  func.func @bn_act_kernel(%arg0: i32, %arg1: memref<128x128xf32, #tpu.memory_space<vmem>>, %arg2: memref<1x128xf32, #tpu.memory_space<vmem>>, %arg3: memref<1x128xf32, #tpu.memory_space<vmem>>, %arg4: memref<1x128xf32, #tpu.memory_space<vmem>>, %arg5: memref<128x128xbf16, #tpu.memory_space<vmem>>) attributes {dimension_semantics = [#tpu.dimension_semantics<parallel>], iteration_bounds = array<i64: 1>, scalar_prefetch = 0 : i64, scratch_operands = 0 : i64, tpu.core_type = #tpu.core_type<tc>, window_params = [{transform_indices = @transform_0, window_bounds = array<i64: 128, 128>}, {pipeline_mode = #tpu.pipeline_mode<synchronous>, transform_indices = @transform_1, window_bounds = array<i64: 1, 128>}, {pipeline_mode = #tpu.pipeline_mode<synchronous>, transform_indices = @transform_2, window_bounds = array<i64: 1, 128>}, {pipeline_mode = #tpu.pipeline_mode<synchronous>, transform_indices = @transform_3, window_bounds = array<i64: 1, 128>}, {transform_indices = @transform_4, window_bounds = array<i64: 128, 128>}]} {
    %c0 = arith.constant 0 : index
    %c0_0 = arith.constant 0 : index
    %0 = vector.load %arg1[%c0, %c0_0] : memref<128x128xf32, #tpu.memory_space<vmem>>, vector<128x128xf32>
    %c0_1 = arith.constant 0 : index
    %c0_2 = arith.constant 0 : index
    %1 = vector.load %arg2[%c0_1, %c0_2] : memref<1x128xf32, #tpu.memory_space<vmem>>, vector<1x128xf32>
    %2 = vector.broadcast %1 : vector<1x128xf32> to vector<128x128xf32>
    %3 = arith.mulf %0, %2 : vector<128x128xf32>
    %c0_3 = arith.constant 0 : index
    %c0_4 = arith.constant 0 : index
    %4 = vector.load %arg3[%c0_3, %c0_4] : memref<1x128xf32, #tpu.memory_space<vmem>>, vector<1x128xf32>
    %5 = vector.broadcast %4 : vector<1x128xf32> to vector<128x128xf32>
    %6 = arith.addf %3, %5 : vector<128x128xf32>
    %cst = arith.constant 0.000000e+00 : f32
    %7 = vector.broadcast %cst : f32 to vector<128x128xf32>
    %8 = arith.cmpf ogt, %6, %7 : vector<128x128xf32>
    %cst_5 = arith.constant 1.000000e-01 : f32
    %9 = vector.broadcast %cst_5 : f32 to vector<128x128xf32>
    %10 = arith.mulf %9, %6 : vector<128x128xf32>
    %11 = arith.select %8, %6, %10 : vector<128x128xi1>, vector<128x128xf32>
    %c0_6 = arith.constant 0 : index
    %c0_7 = arith.constant 0 : index
    %12 = vector.load %arg4[%c0_6, %c0_7] : memref<1x128xf32, #tpu.memory_space<vmem>>, vector<1x128xf32>
    %13 = vector.broadcast %12 : vector<1x128xf32> to vector<128x128xf32>
    %14 = arith.addf %11, %13 : vector<128x128xf32>
    %15 = arith.truncf %14 : vector<128x128xf32> to vector<128x128xbf16>
    %c0_8 = arith.constant 0 : index
    %c0_9 = arith.constant 0 : index
    %16 = vector.load %arg5[%c0_8, %c0_9] : memref<128x128xbf16, #tpu.memory_space<vmem>>, vector<128x128xbf16>
    tpu.vector_store %arg5[%c0_8, %c0_9], %15 {strides = array<i32>} : memref<128x128xbf16, #tpu.memory_space<vmem>>, vector<128x128xbf16>,
    return
  }
  func.func @transform_0(%arg0: i32) -> (i32, i32) {
    %c0_i32 = arith.constant 0 : i32
    %c0_i32_0 = arith.constant 0 : i32
    return %arg0, %c0_i32 : i32, i32
  }
  func.func @transform_1(%arg0: i32) -> (i32, i32) {
    %c0_i32 = arith.constant 0 : i32
    %c0_i32_0 = arith.constant 0 : i32
    %c0_i32_1 = arith.constant 0 : i32
    return %c0_i32, %c0_i32_0 : i32, i32
  }
  func.func @transform_2(%arg0: i32) -> (i32, i32) {
    %c0_i32 = arith.constant 0 : i32
    %c0_i32_0 = arith.constant 0 : i32
    %c0_i32_1 = arith.constant 0 : i32
    return %c0_i32, %c0_i32_0 : i32, i32
  }
  func.func @transform_3(%arg0: i32) -> (i32, i32) {
    %c0_i32 = arith.constant 0 : i32
    %c0_i32_0 = arith.constant 0 : i32
    %c0_i32_1 = arith.constant 0 : i32
    return %c0_i32, %c0_i32_0 : i32, i32
  }
  func.func @transform_4(%arg0: i32) -> (i32, i32) {
    %c0_i32 = arith.constant 0 : i32
    %c0_i32_0 = arith.constant 0 : i32
    return %arg0, %c0_i32 : i32, i32
  }
}

module attributes {stable_mosaic.version = 11 : i64} {
  func.func @bn_act_kernel(%arg0: i32, %arg1: memref<128x128xf32, #tpu.memory_space<vmem>>, %arg2: memref<1x128xf32, #tpu.memory_space<vmem>>, %arg3: memref<1x128xf32, #tpu.memory_space<vmem>>, %arg4: memref<1x128xf32, #tpu.memory_space<vmem>>, %arg5: memref<128x128xf32, #tpu.memory_space<vmem>>) attributes {dimension_semantics = [#tpu.dimension_semantics<parallel>], iteration_bounds = array<i64: 1>, scalar_prefetch = 0 : i64, scratch_operands = 0 : i64, tpu.core_type = #tpu.core_type<tc>, window_params = [{transform_indices = @transform_0, window_bounds = array<i64: 128, 128>}, {pipeline_mode = #tpu.pipeline_mode<synchronous>, transform_indices = @transform_1, window_bounds = array<i64: 1, 128>}, {pipeline_mode = #tpu.pipeline_mode<synchronous>, transform_indices = @transform_2, window_bounds = array<i64: 1, 128>}, {pipeline_mode = #tpu.pipeline_mode<synchronous>, transform_indices = @transform_3, window_bounds = array<i64: 1, 128>}, {transform_indices = @transform_4, window_bounds = array<i64: 128, 128>}]} {
    %c0 = arith.constant 0 : index
    %c0_0 = arith.constant 0 : index
    %0 = vector.load %arg1[%c0, %c0_0] : memref<128x128xf32, #tpu.memory_space<vmem>>, vector<128x128xf32>
    %c0_1 = arith.constant 0 : index
    %c0_2 = arith.constant 0 : index
    %1 = vector.load %arg2[%c0_1, %c0_2] : memref<1x128xf32, #tpu.memory_space<vmem>>, vector<1x128xf32>
    %2 = vector.broadcast %1 : vector<1x128xf32> to vector<128x128xf32>
    %3 = arith.mulf %0, %2 : vector<128x128xf32>
    %c0_3 = arith.constant 0 : index
    %c0_4 = arith.constant 0 : index
    %4 = vector.load %arg3[%c0_3, %c0_4] : memref<1x128xf32, #tpu.memory_space<vmem>>, vector<1x128xf32>
    %5 = vector.broadcast %4 : vector<1x128xf32> to vector<128x128xf32>
    %6 = arith.addf %3, %5 : vector<128x128xf32>
    %cst = arith.constant 0.000000e+00 : f32
    %7 = vector.broadcast %cst : f32 to vector<128x128xf32>
    %8 = arith.cmpf ogt, %6, %7 : vector<128x128xf32>
    %cst_5 = arith.constant 1.000000e-01 : f32
    %9 = vector.broadcast %cst_5 : f32 to vector<128x128xf32>
    %10 = arith.mulf %9, %6 : vector<128x128xf32>
    %11 = arith.select %8, %6, %10 : vector<128x128xi1>, vector<128x128xf32>
    %c0_6 = arith.constant 0 : index
    %c0_7 = arith.constant 0 : index
    %12 = vector.load %arg4[%c0_6, %c0_7] : memref<1x128xf32, #tpu.memory_space<vmem>>, vector<1x128xf32>
    %13 = vector.broadcast %12 : vector<1x128xf32> to vector<128x128xf32>
    %14 = arith.addf %11, %13 : vector<128x128xf32>
    %c0_8 = arith.constant 0 : index
    %c0_9 = arith.constant 0 : index
    %15 = vector.load %arg5[%c0_8, %c0_9] : memref<128x128xf32, #tpu.memory_space<vmem>>, vector<128x128xf32>
    tpu.vector_store %arg5[%c0_8, %c0_9], %14 {strides = array<i32>} : memref<128x128xf32, #tpu.memory_space<vmem>>, vector<128x128xf32>,
    return
  }
  func.func @transform_0(%arg0: i32) -> (i32, i32) {
    %c0_i32 = arith.constant 0 : i32
    %c0_i32_0 = arith.constant 0 : i32
    return %arg0, %c0_i32 : i32, i32
  }
  func.func @transform_1(%arg0: i32) -> (i32, i32) {
    %c0_i32 = arith.constant 0 : i32
    %c0_i32_0 = arith.constant 0 : i32
    %c0_i32_1 = arith.constant 0 : i32
    return %c0_i32, %c0_i32_0 : i32, i32
  }
  func.func @transform_2(%arg0: i32) -> (i32, i32) {
    %c0_i32 = arith.constant 0 : i32
    %c0_i32_0 = arith.constant 0 : i32
    %c0_i32_1 = arith.constant 0 : i32
    return %c0_i32, %c0_i32_0 : i32, i32
  }
  func.func @transform_3(%arg0: i32) -> (i32, i32) {
    %c0_i32 = arith.constant 0 : i32
    %c0_i32_0 = arith.constant 0 : i32
    %c0_i32_1 = arith.constant 0 : i32
    return %c0_i32, %c0_i32_0 : i32, i32
  }
  func.func @transform_4(%arg0: i32) -> (i32, i32) {
    %c0_i32 = arith.constant 0 : i32
    %c0_i32_0 = arith.constant 0 : i32
    return %arg0, %c0_i32 : i32, i32
  }
}

</mosaic_0001>

<llo_original>
// kernel: mul.7
$region0: #{mul.7}
  #allocation0 [shape = 's32[1]{0}', space=sflag, size = 0x4, scoped, tag = 'scoped memory for mul.7']
  %s0 = inlined_call_operand.vmem [shape: f32[52], index: 0, kind: input, shape index: {}]
  %s1 = inlined_call_operand.vmem [shape: f32[52], index: 1, kind: input, shape index: {}]
  %s2 = inlined_call_operand.vmem [shape: f32[52], index: 2, kind: output, shape index: {}]
  %v3 = vld [vmem:[%s0] sm:$0x1]
  %v4 = vld [vmem:[%s1] sm:$0x1]
  %5 = xla_tuple %v3, %v4
  %6 = xla_tuple %5
  %v7 = vmul.f32 %v3, %v4
  %8 = xla_tuple %v7
  %9 = vst [vmem:[%s2] sm:$0x1] %v7

// kernel: gcn_forward.4
$region0: #{gcn_forward.4}
  #allocation0 [shape = 'u32[]', space=smem, size = 0x4, offset = 0x4, fixed_abs, tag = 'smem constant byte address 0x4 - core index']
  #allocation1 [shape = 'u32[144,128]{1,0:T(1,128)}', space=vmem, size = 0x12000, scoped, tag = 'internal scratch']
  %s0 = inlined_call_operand.vmem [shape: bf16[128,128], index: 0, kind: input, shape index: {}]
  %s1 = inlined_call_operand.vmem [shape: bf16[128,128], index: 1, kind: input, shape index: {}]
  %s2 = inlined_call_operand.vmem [shape: bf16[128,128], index: 2, kind: input, shape index: {}]
  %s3 = inlined_call_operand.vmem [shape: f32[128,128], index: 3, kind: output, shape index: {0}]
  %s4 = inlined_call_operand.vmem [shape: f32[8,128], index: 4, kind: output, shape index: {1}]
  %s5 = inlined_call_operand.vmem [shape: f32[8,128], index: 5, kind: output, shape index: {2}]
  %6 = xla_tuple %s3, %s4, %s5
  %s7 = sld [smem:[#allocation0]]
  $region38: #{gcn_forward.4} parent=0
    _
  %s9 = ssub.s32 1, %s7
  %s10 = scalar_select 0, %s9, %s7
  // Predicated region
  $region2: #{gcn_forward.4} parent=0 // pred_check
    _
  $region3: #{gcn_forward.4} parent=0 // pred_check_branch
    %12 = sbr.rel (0) target = $region5
  $region4: #{gcn_forward.4} parent=0 // pred_region
    _
  $region5: #{gcn_forward.4} parent=0 // pred_fallthru
    _
  // Predicated region
  $region6: #{gcn_forward.4} parent=0 // pred_check
    _
  $region7: #{gcn_forward.4} parent=0 // pred_check_branch
    %14 = sbr.rel (0) target = $region9
  $region8: #{gcn_forward.4} parent=0 // pred_region
    _
  $region9: #{gcn_forward.4} parent=0 // pred_fallthru
    _
  // Predicated region
  $region10: #{gcn_forward.4} parent=0 // pred_check
    _
  $region11: #{gcn_forward.4} parent=0 // pred_check_branch
    %16 = sbr.rel (0) target = $region13
  $region12: #{gcn_forward.4} parent=0 // pred_region
    _
  $region13: #{gcn_forward.4} parent=0 // pred_fallthru
    _
  %v18 = vld [vmem:[%s0] sm:$0xf]
  %v19 = vld [vmem:[%s0 + $0x4] sm:$0xf]
  %v20 = vld [vmem:[%s0 + $0x8] sm:$0xf]
  %v21 = vld [vmem:[%s0 + $0xc] sm:$0xf]
  %v22 = vld [vmem:[%s0 + $0x10] sm:$0xf]
  %v23 = vld [vmem:[%s0 + $0x14] sm:$0xf]
  %v24 = vld [vmem:[%s0 + $0x18] sm:$0xf]
  %v25 = vld [vmem:[%s0 + $0x1c] sm:$0xf]
  %v26 = vld [vmem:[%s0 + $0x20] sm:$0xf]
  %v27 = vld [vmem:[%s0 + $0x24] sm:$0xf]
  %v28 = vld [vmem:[%s0 + $0x28] sm:$0xf]
  %v29 = vld [vmem:[%s0 + $0x2c] sm:$0xf]
  %v30 = vld [vmem:[%s0 + $0x30] sm:$0xf]
  %v31 = vld [vmem:[%s0 + $0x34] sm:$0xf]
  %v32 = vld [vmem:[%s0 + $0x38] sm:$0xf]
  %v33 = vld [vmem:[%s0 + $0x3c] sm:$0xf]
  %v34 = vld [vmem:[%s1] sm:$0xf]
  %v35 = vld [vmem:[%s1 + $0x4] sm:$0xf]
  %v36 = vld [vmem:[%s1 + $0x8] sm:$0xf]
  %v37 = vld [vmem:[%s1 + $0xc] sm:$0xf]
  %v38 = vld [vmem:[%s1 + $0x10] sm:$0xf]
  %v39 = vld [vmem:[%s1 + $0x14] sm:$0xf]
  %v40 = vld [vmem:[%s1 + $0x18] sm:$0xf]
  %v41 = vld [vmem:[%s1 + $0x1c] sm:$0xf]
  %v42 = vld [vmem:[%s1 + $0x20] sm:$0xf]
  %v43 = vld [vmem:[%s1 + $0x24] sm:$0xf]
  %v44 = vld [vmem:[%s1 + $0x28] sm:$0xf]
  %v45 = vld [vmem:[%s1 + $0x2c] sm:$0xf]
  %v46 = vld [vmem:[%s1 + $0x30] sm:$0xf]
  %v47 = vld [vmem:[%s1 + $0x34] sm:$0xf]
  %v48 = vld [vmem:[%s1 + $0x38] sm:$0xf]
  %v49 = vld [vmem:[%s1 + $0x3c] sm:$0xf]
  %v66 = vunpack.c.l.b16 %v18
  %v67 = vunpack.c.l.b16 %v19
  %v68 = vunpack.c.l.b16 %v20
  %v69 = vunpack.c.l.b16 %v21
  %v70 = vunpack.c.l.b16 %v22
  %v71 = vunpack.c.l.b16 %v23
  %v72 = vunpack.c.l.b16 %v24
  %v73 = vunpack.c.l.b16 %v25
  %v74 = vunpack.c.l.b16 %v26
  %v75 = vunpack.c.l.b16 %v27
  %v76 = vunpack.c.l.b16 %v28
  %v77 = vunpack.c.l.b16 %v29
  %v78 = vunpack.c.l.b16 %v30
  %v79 = vunpack.c.l.b16 %v31
  %v80 = vunpack.c.l.b16 %v32
  %v81 = vunpack.c.l.b16 %v33
  %v82 = vpack.c.b16 %v67, %v66
  %v83 = vpack.c.b16 %v69, %v68
  %v84 = vpack.c.b16 %v71, %v70
  %v85 = vpack.c.b16 %v73, %v72
  %v86 = vpack.c.b16 %v75, %v74
  %v87 = vpack.c.b16 %v77, %v76
  %v88 = vpack.c.b16 %v79, %v78
  %v89 = vpack.c.b16 %v81, %v80
  %v114 = vunpack.c.l.b16 %v34
  %v115 = vunpack.c.l.b16 %v35
  %v116 = vunpack.c.l.b16 %v36
  %v117 = vunpack.c.l.b16 %v37
  %v118 = vunpack.c.l.b16 %v38
  %v119 = vunpack.c.l.b16 %v39
  %v120 = vunpack.c.l.b16 %v40
  %v121 = vunpack.c.l.b16 %v41
  %v122 = vunpack.c.l.b16 %v42
  %v123 = vunpack.c.l.b16 %v43
  %v124 = vunpack.c.l.b16 %v44
  %v125 = vunpack.c.l.b16 %v45
  %v126 = vunpack.c.l.b16 %v46
  %v127 = vunpack.c.l.b16 %v47
  %v128 = vunpack.c.l.b16 %v48
  %v129 = vunpack.c.l.b16 %v49
  %v130 = vpack.c.b16 %v115, %v114
  %v131 = vpack.c.b16 %v117, %v116
  %v132 = vpack.c.b16 %v119, %v118
  %v133 = vpack.c.b16 %v121, %v120
  %v134 = vpack.c.b16 %v123, %v122
  %v135 = vpack.c.b16 %v125, %v124
  %v136 = vpack.c.b16 %v127, %v126
  %v137 = vpack.c.b16 %v129, %v128
  %146 = vmatprep.subr.bf16.mxu0 0
  %147 = vmatpush1.bf16.msra.mxu0 %v137
  %148 = vmatprep.subr.bf16.mxu0 0
  %149 = vmatpush1.bf16.msra.mxu0 %v136
  %150 = vmatprep.subr.bf16.mxu0 0
  %151 = vmatpush1.bf16.msra.mxu0 %v135
  %152 = vmatprep.subr.bf16.mxu0 0
  %153 = vmatpush1.bf16.msra.mxu0 %v134
  %154 = vmatprep.subr.bf16.mxu0 0
  %155 = vmatpush1.bf16.msra.mxu0 %v133
  %156 = vmatprep.subr.bf16.mxu0 0
  %157 = vmatpush1.bf16.msra.mxu0 %v132
  %158 = vmatprep.subr.bf16.mxu0 0
  %159 = vmatpush1.bf16.msra.mxu0 %v131
  %160 = vmatprep.subr.bf16.mxu0 0
  %161 = vmatpush1.bf16.msra.mxu0 %v130
  %162 = vmatprep.subr.bf16.mxu0 0
  %163 = vmatpush2.bf16.msra.mxu0 0
  %164 = vmatprep.subr.bf16.mxu0 0
  %165 = vmatpush2.bf16.msra.mxu0 0
  %166 = vmatprep.subr.bf16.mxu0 0
  %167 = vmatpush2.bf16.msra.mxu0 0
  %168 = vmatprep.subr.bf16.mxu0 0
  %169 = vmatpush2.bf16.msra.mxu0 0
  %170 = vmatprep.subr.bf16.mxu0 0
  %171 = vmatpush2.bf16.msra.mxu0 0
  %172 = vmatprep.subr.bf16.mxu0 0
  %173 = vmatpush2.bf16.msra.mxu0 0
  %174 = vmatprep.subr.bf16.mxu0 0
  %175 = vmatpush2.bf16.msra.mxu0 0
  %176 = vmatprep.subr.bf16.mxu0 0
  %177 = vmatpush2.bf16.msra.mxu0 0
  %178 = vmatprep.mubr.bf16.mxu0 0
  %179 = vmatmul.mubr.bf16.gmra.mxu0 %v82
  %v180 = vpop.f32.mrf.mxu0
  %v181 = vadd.f32 0.0, %v180
  %v182 = vpop.f32.mrf.mxu0
  %v183 = vpop.f32.mrf.mxu0
  %v184 = vadd.f32 0.0, %v183
  %v185 = vpop.f32.mrf.mxu0
  %186 = vmatprep.mubr.bf16.mxu0 0
  %187 = vmatmul.mubr.bf16.gmra.mxu0 %v83
  %v188 = vpop.f32.mrf.mxu0
  %v189 = vadd.f32 0.0, %v188
  %v190 = vpop.f32.mrf.mxu0
  %v191 = vpop.f32.mrf.mxu0
  %v192 = vadd.f32 0.0, %v191
  %v193 = vpop.f32.mrf.mxu0
  %194 = vmatprep.mubr.bf16.mxu0 0
  %195 = vmatmul.mubr.bf16.gmra.mxu0 %v84
  %v196 = vpop.f32.mrf.mxu0
  %v197 = vadd.f32 0.0, %v196
  %v198 = vpop.f32.mrf.mxu0
  %v199 = vpop.f32.mrf.mxu0
  %v200 = vadd.f32 0.0, %v199
  %v201 = vpop.f32.mrf.mxu0
  %202 = vmatprep.mubr.bf16.mxu0 0
  %203 = vmatmul.mubr.bf16.gmra.mxu0 %v85
  %v204 = vpop.f32.mrf.mxu0
  %v205 = vadd.f32 0.0, %v204
  %v206 = vpop.f32.mrf.mxu0
  %v207 = vpop.f32.mrf.mxu0
  %v208 = vadd.f32 0.0, %v207
  %v209 = vpop.f32.mrf.mxu0
  %210 = vmatprep.mubr.bf16.mxu0 0
  %211 = vmatmul.mubr.bf16.gmra.mxu0 %v86
  %v212 = vpop.f32.mrf.mxu0
  %v213 = vadd.f32 0.0, %v212
  %v214 = vpop.f32.mrf.mxu0
  %v215 = vpop.f32.mrf.mxu0
  %v216 = vadd.f32 0.0, %v215
  %v217 = vpop.f32.mrf.mxu0
  %218 = vmatprep.mubr.bf16.mxu0 0
  %219 = vmatmul.mubr.bf16.gmra.mxu0 %v87
  %v220 = vpop.f32.mrf.mxu0
  %v221 = vadd.f32 0.0, %v220
  %v222 = vpop.f32.mrf.mxu0
  %v223 = vpop.f32.mrf.mxu0
  %v224 = vadd.f32 0.0, %v223
  %v225 = vpop.f32.mrf.mxu0
  %226 = vmatprep.mubr.bf16.mxu0 0
  %227 = vmatmul.mubr.bf16.gmra.mxu0 %v88
  %v228 = vpop.f32.mrf.mxu0
  %v229 = vadd.f32 0.0, %v228
  %v230 = vpop.f32.mrf.mxu0
  %v231 = vpop.f32.mrf.mxu0
  %v232 = vadd.f32 0.0, %v231
  %v233 = vpop.f32.mrf.mxu0
  %234 = vmatprep.mubr.bf16.mxu0 0
  %235 = vmatmul.mubr.bf16.gmra.mxu0 %v89
  %v236 = vpop.f32.mrf.mxu0
  %v237 = vadd.f32 0.0, %v236
  %v238 = vpop.f32.mrf.mxu0
  %v239 = vpop.f32.mrf.mxu0
  %v240 = vadd.f32 0.0, %v239
  %v241 = vpop.f32.mrf.mxu0
  %242 = vdwg.mxu0
  %v243 = vpack.c.bf16 %v184, %v181
  %v244 = vpack.c.bf16 %v192, %v189
  %v245 = vpack.c.bf16 %v200, %v197
  %v246 = vpack.c.bf16 %v208, %v205
  %v247 = vpack.c.bf16 %v216, %v213
  %v248 = vpack.c.bf16 %v224, %v221
  %v249 = vpack.c.bf16 %v232, %v229
  %v250 = vpack.c.bf16 %v240, %v237
  %v251 = vld [vmem:[%s2] sm:$0xf]
  %v252 = vld [vmem:[%s2 + $0x4] sm:$0xf]
  %v253 = vld [vmem:[%s2 + $0x8] sm:$0xf]
  %v254 = vld [vmem:[%s2 + $0xc] sm:$0xf]
  %v255 = vld [vmem:[%s2 + $0x10] sm:$0xf]
  %v256 = vld [vmem:[%s2 + $0x14] sm:$0xf]
  %v257 = vld [vmem:[%s2 + $0x18] sm:$0xf]
  %v258 = vld [vmem:[%s2 + $0x1c] sm:$0xf]
  %v259 = vld [vmem:[%s2 + $0x20] sm:$0xf]
  %v260 = vld [vmem:[%s2 + $0x24] sm:$0xf]
  %v261 = vld [vmem:[%s2 + $0x28] sm:$0xf]
  %v262 = vld [vmem:[%s2 + $0x2c] sm:$0xf]
  %v263 = vld [vmem:[%s2 + $0x30] sm:$0xf]
  %v264 = vld [vmem:[%s2 + $0x34] sm:$0xf]
  %v265 = vld [vmem:[%s2 + $0x38] sm:$0xf]
  %v266 = vld [vmem:[%s2 + $0x3c] sm:$0xf]
  %v283 = vunpack.c.l.b16 %v251
  %v284 = vunpack.c.l.b16 %v252
  %v285 = vunpack.c.l.b16 %v253
  %v286 = vunpack.c.l.b16 %v254
  %v287 = vunpack.c.l.b16 %v255
  %v288 = vunpack.c.l.b16 %v256
  %v289 = vunpack.c.l.b16 %v257
  %v290 = vunpack.c.l.b16 %v258
  %v291 = vunpack.c.l.b16 %v259
  %v292 = vunpack.c.l.b16 %v260
  %v293 = vunpack.c.l.b16 %v261
  %v294 = vunpack.c.l.b16 %v262
  %v295 = vunpack.c.l.b16 %v263
  %v296 = vunpack.c.l.b16 %v264
  %v297 = vunpack.c.l.b16 %v265
  %v298 = vunpack.c.l.b16 %v266
  %v299 = vpack.c.b16 %v284, %v283
  %v300 = vpack.c.b16 %v286, %v285
  %v301 = vpack.c.b16 %v288, %v287
  %v302 = vpack.c.b16 %v290, %v289
  %v303 = vpack.c.b16 %v292, %v291
  %v304 = vpack.c.b16 %v294, %v293
  %v305 = vpack.c.b16 %v296, %v295
  %v306 = vpack.c.b16 %v298, %v297
  %315 = vmatprep.subr.bf16.mxu0 0
  %316 = vmatpush1.bf16.msra.mxu0 %v306
  %317 = vmatprep.subr.bf16.mxu0 0
  %318 = vmatpush1.bf16.msra.mxu0 %v305
  %319 = vmatprep.subr.bf16.mxu0 0
  %320 = vmatpush1.bf16.msra.mxu0 %v304
  %321 = vmatprep.subr.bf16.mxu0 0
  %322 = vmatpush1.bf16.msra.mxu0 %v303
  %323 = vmatprep.subr.bf16.mxu0 0
  %324 = vmatpush1.bf16.msra.mxu0 %v302
  %325 = vmatprep.subr.bf16.mxu0 0
  %326 = vmatpush1.bf16.msra.mxu0 %v301
  %327 = vmatprep.subr.bf16.mxu0 0
  %328 = vmatpush1.bf16.msra.mxu0 %v300
  %329 = vmatprep.subr.bf16.mxu0 0
  %330 = vmatpush1.bf16.msra.mxu0 %v299
  %331 = vmatprep.subr.bf16.mxu0 0
  %332 = vmatpush2.bf16.msra.mxu0 0
  %333 = vmatprep.subr.bf16.mxu0 0
  %334 = vmatpush2.bf16.msra.mxu0 0
  %335 = vmatprep.subr.bf16.mxu0 0
  %336 = vmatpush2.bf16.msra.mxu0 0
  %337 = vmatprep.subr.bf16.mxu0 0
  %338 = vmatpush2.bf16.msra.mxu0 0
  %339 = vmatprep.subr.bf16.mxu0 0
  %340 = vmatpush2.bf16.msra.mxu0 0
  %341 = vmatprep.subr.bf16.mxu0 0
  %342 = vmatpush2.bf16.msra.mxu0 0
  %343 = vmatprep.subr.bf16.mxu0 0
  %344 = vmatpush2.bf16.msra.mxu0 0
  %345 = vmatprep.subr.bf16.mxu0 0
  %346 = vmatpush2.bf16.msra.mxu0 0
  %347 = vmatprep.mubr.bf16.mxu0 0
  %348 = vmatmul.mubr.bf16.gmra.mxu0 %v243
  %v349 = vpop.f32.mrf.mxu0
  %v350 = vadd.f32 0.0, %v349
  %v351 = vpop.f32.mrf.mxu0
  %v352 = vpop.f32.mrf.mxu0
  %v353 = vadd.f32 0.0, %v352
  %v354 = vpop.f32.mrf.mxu0
  %355 = vmatprep.mubr.bf16.mxu0 0
  %356 = vmatmul.mubr.bf16.gmra.mxu0 %v244
  %v357 = vpop.f32.mrf.mxu0
  %v358 = vadd.f32 0.0, %v357
  %v359 = vpop.f32.mrf.mxu0
  %v360 = vpop.f32.mrf.mxu0
  %v361 = vadd.f32 0.0, %v360
  %v362 = vpop.f32.mrf.mxu0
  %363 = vmatprep.mubr.bf16.mxu0 0
  %364 = vmatmul.mubr.bf16.gmra.mxu0 %v245
  %v365 = vpop.f32.mrf.mxu0
  %v366 = vadd.f32 0.0, %v365
  %v367 = vpop.f32.mrf.mxu0
  %v368 = vpop.f32.mrf.mxu0
  %v369 = vadd.f32 0.0, %v368
  %v370 = vpop.f32.mrf.mxu0
  %371 = vmatprep.mubr.bf16.mxu0 0
  %372 = vmatmul.mubr.bf16.gmra.mxu0 %v246
  %v373 = vpop.f32.mrf.mxu0
  %v374 = vadd.f32 0.0, %v373
  %v375 = vpop.f32.mrf.mxu0
  %v376 = vpop.f32.mrf.mxu0
  %v377 = vadd.f32 0.0, %v376
  %v378 = vpop.f32.mrf.mxu0
  %379 = vmatprep.mubr.bf16.mxu0 0
  %380 = vmatmul.mubr.bf16.gmra.mxu0 %v247
  %v381 = vpop.f32.mrf.mxu0
  %v382 = vadd.f32 0.0, %v381
  %v383 = vpop.f32.mrf.mxu0
  %v384 = vpop.f32.mrf.mxu0
  %v385 = vadd.f32 0.0, %v384
  %v386 = vpop.f32.mrf.mxu0
  %387 = vmatprep.mubr.bf16.mxu0 0
  %388 = vmatmul.mubr.bf16.gmra.mxu0 %v248
  %v389 = vpop.f32.mrf.mxu0
  %v390 = vadd.f32 0.0, %v389
  %v391 = vpop.f32.mrf.mxu0
  %v392 = vpop.f32.mrf.mxu0
  %v393 = vadd.f32 0.0, %v392
  %v394 = vpop.f32.mrf.mxu0
  %395 = vmatprep.mubr.bf16.mxu0 0
  %396 = vmatmul.mubr.bf16.gmra.mxu0 %v249
  %v397 = vpop.f32.mrf.mxu0
  %v398 = vadd.f32 0.0, %v397
  %v399 = vpop.f32.mrf.mxu0
  %v400 = vpop.f32.mrf.mxu0
  %v401 = vadd.f32 0.0, %v400
  %v402 = vpop.f32.mrf.mxu0
  %403 = vmatprep.mubr.bf16.mxu0 0
  %404 = vmatmul.mubr.bf16.gmra.mxu0 %v250
  %v405 = vpop.f32.mrf.mxu0
  %v406 = vadd.f32 0.0, %v405
  %v407 = vpop.f32.mrf.mxu0
  %v408 = vpop.f32.mrf.mxu0
  %v409 = vadd.f32 0.0, %v408
  %v410 = vpop.f32.mrf.mxu0
  %411 = vdwg.mxu0
  %412 = vst [vmem:[%s3] sm:$0xff] %v350
  %413 = vst [vmem:[%s3 + $0x8] sm:$0xff] %v353
  %414 = vst [vmem:[%s3 + $0x10] sm:$0xff] %v358
  %415 = vst [vmem:[%s3 + $0x18] sm:$0xff] %v361
  %416 = vst [vmem:[%s3 + $0x20] sm:$0xff] %v366
  %417 = vst [vmem:[%s3 + $0x28] sm:$0xff] %v369
  %418 = vst [vmem:[%s3 + $0x30] sm:$0xff] %v374
  %419 = vst [vmem:[%s3 + $0x38] sm:$0xff] %v377
  %420 = vst [vmem:[%s3 + $0x40] sm:$0xff] %v382
  %421 = vst [vmem:[%s3 + $0x48] sm:$0xff] %v385
  %422 = vst [vmem:[%s3 + $0x50] sm:$0xff] %v390
  %423 = vst [vmem:[%s3 + $0x58] sm:$0xff] %v393
  %424 = vst [vmem:[%s3 + $0x60] sm:$0xff] %v398
  %425 = vst [vmem:[%s3 + $0x68] sm:$0xff] %v401
  %426 = vst [vmem:[%s3 + $0x70] sm:$0xff] %v406
  %427 = vst [vmem:[%s3 + $0x78] sm:$0xff] %v409
  %v428 = vadd.f32 %v350, %v353
  %v429 = vadd.f32 %v428, %v358
  %v430 = vadd.f32 %v429, %v361
  %v431 = vadd.f32 %v430, %v366
  %v432 = vadd.f32 %v431, %v369
  %v433 = vadd.f32 %v432, %v374
  %v434 = vadd.f32 %v433, %v377
  %v435 = vadd.f32 %v434, %v382
  %v436 = vadd.f32 %v435, %v385
  %v437 = vadd.f32 %v436, %v390
  %v438 = vadd.f32 %v437, %v393
  %v439 = vadd.f32 %v438, %v398
  %v440 = vadd.f32 %v439, %v401
  %v441 = vadd.f32 %v440, %v406
  %v442 = vadd.f32 %v441, %v409
  %v443 = vrot.slane %v442, 4
  %v444 = vadd.f32 %v442, %v443
  %v445 = vrot.slane %v444, 2
  %v446 = vadd.f32 %v444, %v445
  %v447 = vrot.slane %v446, 1
  %v448 = vadd.f32 %v446, %v447
  %449 = vst [vmem:[%s4] sm:$0xff] %v448
  %v450 = vmul.f32 %v350, %v350
  %v451 = vmul.f32 %v353, %v353
  %v452 = vmul.f32 %v358, %v358
  %v453 = vmul.f32 %v361, %v361
  %v454 = vmul.f32 %v366, %v366
  %v455 = vmul.f32 %v369, %v369
  %v456 = vmul.f32 %v374, %v374
  %v457 = vmul.f32 %v377, %v377
  %v458 = vmul.f32 %v382, %v382
  %v459 = vmul.f32 %v385, %v385
  %v460 = vmul.f32 %v390, %v390
  %v461 = vmul.f32 %v393, %v393
  %v462 = vmul.f32 %v398, %v398
  %v463 = vmul.f32 %v401, %v401
  %v464 = vmul.f32 %v406, %v406
  %v465 = vmul.f32 %v409, %v409
  %v466 = vadd.f32 %v450, %v451
  %v467 = vadd.f32 %v466, %v452
  %v468 = vadd.f32 %v467, %v453
  %v469 = vadd.f32 %v468, %v454
  %v470 = vadd.f32 %v469, %v455
  %v471 = vadd.f32 %v470, %v456
  %v472 = vadd.f32 %v471, %v457
  %v473 = vadd.f32 %v472, %v458
  %v474 = vadd.f32 %v473, %v459
  %v475 = vadd.f32 %v474, %v460
  %v476 = vadd.f32 %v475, %v461
  %v477 = vadd.f32 %v476, %v462
  %v478 = vadd.f32 %v477, %v463
  %v479 = vadd.f32 %v478, %v464
  %v480 = vadd.f32 %v479, %v465
  %v481 = vrot.slane %v480, 4
  %v482 = vadd.f32 %v480, %v481
  %v483 = vrot.slane %v482, 2
  %v484 = vadd.f32 %v482, %v483
  %v485 = vrot.slane %v484, 1
  %v486 = vadd.f32 %v484, %v485
  %487 = vst [vmem:[%s5] sm:$0xff] %v486
  // Predicated region
  $region14: #{gcn_forward.4} parent=0 // pred_check
    _
  $region15: #{gcn_forward.4} parent=0 // pred_check_branch
    %489 = sbr.rel (0) target = $region17
  $region16: #{gcn_forward.4} parent=0 // pred_region
    _
  $region17: #{gcn_forward.4} parent=0 // pred_fallthru
    _
  // Predicated region
  $region18: #{gcn_forward.4} parent=0 // pred_check
    _
  $region19: #{gcn_forward.4} parent=0 // pred_check_branch
    %491 = sbr.rel (0) target = $region21
  $region20: #{gcn_forward.4} parent=0 // pred_region
    _
  $region21: #{gcn_forward.4} parent=0 // pred_fallthru
    _
  // Predicated region
  $region22: #{gcn_forward.4} parent=0 // pred_check
    _
  $region23: #{gcn_forward.4} parent=0 // pred_check_branch
    %493 = sbr.rel (0) target = $region25
  $region24: #{gcn_forward.4} parent=0 // pred_region
    _
  $region25: #{gcn_forward.4} parent=0 // pred_fallthru
    _
  // Predicated region
  $region26: #{gcn_forward.4} parent=0 // pred_check
    _
  $region27: #{gcn_forward.4} parent=0 // pred_check_branch
    %495 = sbr.rel (0) target = $region29
  $region28: #{gcn_forward.4} parent=0 // pred_region
    _
  $region29: #{gcn_forward.4} parent=0 // pred_fallthru
    _
  // Predicated region
  $region30: #{gcn_forward.4} parent=0 // pred_check
    _
  $region31: #{gcn_forward.4} parent=0 // pred_check_branch
    %497 = sbr.rel (0) target = $region33
  $region32: #{gcn_forward.4} parent=0 // pred_region
    _
  $region33: #{gcn_forward.4} parent=0 // pred_fallthru
    _
  // Predicated region
  $region34: #{gcn_forward.4} parent=0 // pred_check
    _
  $region35: #{gcn_forward.4} parent=0 // pred_check_branch
    %499 = sbr.rel (0) target = $region37
  $region36: #{gcn_forward.4} parent=0 // pred_region
    _
  $region37: #{gcn_forward.4} parent=0 // pred_fallthru
    _

// kernel: gcn_forward.5
$region0: #{gcn_forward.5}
  #allocation0 [shape = 'u32[]', space=smem, size = 0x4, offset = 0x4, fixed_abs, tag = 'smem constant byte address 0x4 - core index']
  #allocation1 [shape = 'u32[144,128]{1,0:T(1,128)}', space=vmem, size = 0x12000, scoped, tag = 'internal scratch']
  %s0 = inlined_call_operand.vmem [shape: f32[128,128], index: 0, kind: input, shape index: {}]
  %s1 = inlined_call_operand.vmem [shape: f32[1,128], index: 1, kind: input, shape index: {}]
  %s2 = inlined_call_operand.vmem [shape: f32[1,128], index: 2, kind: input, shape index: {}]
  %s3 = inlined_call_operand.vmem [shape: f32[1,128], index: 3, kind: input, shape index: {}]
  %s4 = inlined_call_operand.vmem [shape: bf16[128,128], index: 4, kind: output, shape index: {}]
  %s5 = sld [smem:[#allocation0]]
  $region26: #{gcn_forward.5} parent=0
    _
  %s7 = ssub.s32 1, %s5
  %s8 = scalar_select 0, %s7, %s5
  // Predicated region
  $region2: #{gcn_forward.5} parent=0 // pred_check
    _
  $region3: #{gcn_forward.5} parent=0 // pred_check_branch
    %10 = sbr.rel (0) target = $region5
  $region4: #{gcn_forward.5} parent=0 // pred_region
    _
  $region5: #{gcn_forward.5} parent=0 // pred_fallthru
    _
  // Predicated region
  $region6: #{gcn_forward.5} parent=0 // pred_check
    _
  $region7: #{gcn_forward.5} parent=0 // pred_check_branch
    %12 = sbr.rel (0) target = $region9
  $region8: #{gcn_forward.5} parent=0 // pred_region
    _
  $region9: #{gcn_forward.5} parent=0 // pred_fallthru
    _
  // Predicated region
  $region10: #{gcn_forward.5} parent=0 // pred_check
    _
  $region11: #{gcn_forward.5} parent=0 // pred_check_branch
    %14 = sbr.rel (0) target = $region13
  $region12: #{gcn_forward.5} parent=0 // pred_region
    _
  $region13: #{gcn_forward.5} parent=0 // pred_fallthru
    _
  // Predicated region
  $region14: #{gcn_forward.5} parent=0 // pred_check
    _
  $region15: #{gcn_forward.5} parent=0 // pred_check_branch
    %16 = sbr.rel (0) target = $region17
  $region16: #{gcn_forward.5} parent=0 // pred_region
    _
  $region17: #{gcn_forward.5} parent=0 // pred_fallthru
    _
  %v17 = vld [vmem:[%s0] sm:$0xff]
  %v18 = vld [vmem:[%s0 + $0x8] sm:$0xff]
  %v19 = vld [vmem:[%s0 + $0x10] sm:$0xff]
  %v20 = vld [vmem:[%s0 + $0x18] sm:$0xff]
  %v21 = vld [vmem:[%s0 + $0x20] sm:$0xff]
  %v22 = vld [vmem:[%s0 + $0x28] sm:$0xff]
  %v23 = vld [vmem:[%s0 + $0x30] sm:$0xff]
  %v24 = vld [vmem:[%s0 + $0x38] sm:$0xff]
  %v25 = vld [vmem:[%s0 + $0x40] sm:$0xff]
  %v26 = vld [vmem:[%s0 + $0x48] sm:$0xff]
  %v27 = vld [vmem:[%s0 + $0x50] sm:$0xff]
  %v28 = vld [vmem:[%s0 + $0x58] sm:$0xff]
  %v29 = vld [vmem:[%s0 + $0x60] sm:$0xff]
  %v30 = vld [vmem:[%s0 + $0x68] sm:$0xff]
  %v31 = vld [vmem:[%s0 + $0x70] sm:$0xff]
  %v32 = vld [vmem:[%s0 + $0x78] sm:$0xff]
  %v33 = vld [vmem:[%s1] sm:$0x1]
  %v35 = vlaneseq
  %v36 = vshrl.u32 %v35, 7
  %v37 = vsub.s32 0, %v36
  %v38 = vrot.slane %v33, %v37
  %v40 = vmul.f32 %v17, %v38
  %v41 = vmul.f32 %v18, %v38
  %v42 = vmul.f32 %v19, %v38
  %v43 = vmul.f32 %v20, %v38
  %v44 = vmul.f32 %v21, %v38
  %v45 = vmul.f32 %v22, %v38
  %v46 = vmul.f32 %v23, %v38
  %v47 = vmul.f32 %v24, %v38
  %v48 = vmul.f32 %v25, %v38
  %v49 = vmul.f32 %v26, %v38
  %v50 = vmul.f32 %v27, %v38
  %v51 = vmul.f32 %v28, %v38
  %v52 = vmul.f32 %v29, %v38
  %v53 = vmul.f32 %v30, %v38
  %v54 = vmul.f32 %v31, %v38
  %v55 = vmul.f32 %v32, %v38
  %v56 = vld [vmem:[%s2] sm:$0x1]
  %v58 = vlaneseq
  %v59 = vshrl.u32 %v58, 7
  %v60 = vsub.s32 0, %v59
  %v61 = vrot.slane %v56, %v60
  %v63 = vadd.f32 %v40, %v61
  %v64 = vadd.f32 %v41, %v61
  %v65 = vadd.f32 %v42, %v61
  %v66 = vadd.f32 %v43, %v61
  %v67 = vadd.f32 %v44, %v61
  %v68 = vadd.f32 %v45, %v61
  %v69 = vadd.f32 %v46, %v61
  %v70 = vadd.f32 %v47, %v61
  %v71 = vadd.f32 %v48, %v61
  %v72 = vadd.f32 %v49, %v61
  %v73 = vadd.f32 %v50, %v61
  %v74 = vadd.f32 %v51, %v61
  %v75 = vadd.f32 %v52, %v61
  %v76 = vadd.f32 %v53, %v61
  %v77 = vadd.f32 %v54, %v61
  %v78 = vadd.f32 %v55, %v61
  %vm79 = vcmp.gt.f32.partialorder %v63, 0.0
  %vm80 = vcmp.gt.f32.partialorder %v64, 0.0
  %vm81 = vcmp.gt.f32.partialorder %v65, 0.0
  %vm82 = vcmp.gt.f32.partialorder %v66, 0.0
  %vm83 = vcmp.gt.f32.partialorder %v67, 0.0
  %vm84 = vcmp.gt.f32.partialorder %v68, 0.0
  %vm85 = vcmp.gt.f32.partialorder %v69, 0.0
  %vm86 = vcmp.gt.f32.partialorder %v70, 0.0
  %vm87 = vcmp.gt.f32.partialorder %v71, 0.0
  %vm88 = vcmp.gt.f32.partialorder %v72, 0.0
  %vm89 = vcmp.gt.f32.partialorder %v73, 0.0
  %vm90 = vcmp.gt.f32.partialorder %v74, 0.0
  %vm91 = vcmp.gt.f32.partialorder %v75, 0.0
  %vm92 = vcmp.gt.f32.partialorder %v76, 0.0
  %vm93 = vcmp.gt.f32.partialorder %v77, 0.0
  %vm94 = vcmp.gt.f32.partialorder %v78, 0.0
  %v95 = vmul.f32 %v63, 0.1
  %v96 = vmul.f32 %v64, 0.1
  %v97 = vmul.f32 %v65, 0.1
  %v98 = vmul.f32 %v66, 0.1
  %v99 = vmul.f32 %v67, 0.1
  %v100 = vmul.f32 %v68, 0.1
  %v101 = vmul.f32 %v69, 0.1
  %v102 = vmul.f32 %v70, 0.1
  %v103 = vmul.f32 %v71, 0.1
  %v104 = vmul.f32 %v72, 0.1
  %v105 = vmul.f32 %v73, 0.1
  %v106 = vmul.f32 %v74, 0.1
  %v107 = vmul.f32 %v75, 0.1
  %v108 = vmul.f32 %v76, 0.1
  %v109 = vmul.f32 %v77, 0.1
  %v110 = vmul.f32 %v78, 0.1
  %v111 = vsel %vm79, %v63, %v95
  %v112 = vsel %vm80, %v64, %v96
  %v113 = vsel %vm81, %v65, %v97
  %v114 = vsel %vm82, %v66, %v98
  %v115 = vsel %vm83, %v67, %v99
  %v116 = vsel %vm84, %v68, %v100
  %v117 = vsel %vm85, %v69, %v101
  %v118 = vsel %vm86, %v70, %v102
  %v119 = vsel %vm87, %v71, %v103
  %v120 = vsel %vm88, %v72, %v104
  %v121 = vsel %vm89, %v73, %v105
  %v122 = vsel %vm90, %v74, %v106
  %v123 = vsel %vm91, %v75, %v107
  %v124 = vsel %vm92, %v76, %v108
  %v125 = vsel %vm93, %v77, %v109
  %v126 = vsel %vm94, %v78, %v110
  %v127 = vld [vmem:[%s3] sm:$0x1]
  %v129 = vlaneseq
  %v130 = vshrl.u32 %v129, 7
  %v131 = vsub.s32 0, %v130
  %v132 = vrot.slane %v127, %v131
  %v134 = vadd.f32 %v111, %v132
  %v135 = vadd.f32 %v112, %v132
  %v136 = vadd.f32 %v113, %v132
  %v137 = vadd.f32 %v114, %v132
  %v138 = vadd.f32 %v115, %v132
  %v139 = vadd.f32 %v116, %v132
  %v140 = vadd.f32 %v117, %v132
  %v141 = vadd.f32 %v118, %v132
  %v142 = vadd.f32 %v119, %v132
  %v143 = vadd.f32 %v120, %v132
  %v144 = vadd.f32 %v121, %v132
  %v145 = vadd.f32 %v122, %v132
  %v146 = vadd.f32 %v123, %v132
  %v147 = vadd.f32 %v124, %v132
  %v148 = vadd.f32 %v125, %v132
  %v149 = vadd.f32 %v126, %v132
  %v150 = vpack.c.bf16 %v135, %v134
  %v151 = vpack.c.bf16 %v137, %v136
  %v152 = vpack.c.bf16 %v139, %v138
  %v153 = vpack.c.bf16 %v141, %v140
  %v154 = vpack.c.bf16 %v143, %v142
  %v155 = vpack.c.bf16 %v145, %v144
  %v156 = vpack.c.bf16 %v147, %v146
  %v157 = vpack.c.bf16 %v149, %v148
  %v166 = vunpack.c.l.b16 %v150
  %v167 = vunpack.c.h.b16 %v150
  %v168 = vunpack.c.l.b16 %v151
  %v169 = vunpack.c.h.b16 %v151
  %v170 = vunpack.c.l.b16 %v152
  %v171 = vunpack.c.h.b16 %v152
  %v172 = vunpack.c.l.b16 %v153
  %v173 = vunpack.c.h.b16 %v153
  %v174 = vunpack.c.l.b16 %v154
  %v175 = vunpack.c.h.b16 %v154
  %v176 = vunpack.c.l.b16 %v155
  %v177 = vunpack.c.h.b16 %v155
  %v178 = vunpack.c.l.b16 %v156
  %v179 = vunpack.c.h.b16 %v156
  %v180 = vunpack.c.l.b16 %v157
  %v181 = vunpack.c.h.b16 %v157
  %v182 = vpack.c.b16 %v166, %v166
  %v183 = vpack.c.b16 %v167, %v167
  %v184 = vpack.c.b16 %v168, %v168
  %v185 = vpack.c.b16 %v169, %v169
  %v186 = vpack.c.b16 %v170, %v170
  %v187 = vpack.c.b16 %v171, %v171
  %v188 = vpack.c.b16 %v172, %v172
  %v189 = vpack.c.b16 %v173, %v173
  %v190 = vpack.c.b16 %v174, %v174
  %v191 = vpack.c.b16 %v175, %v175
  %v192 = vpack.c.b16 %v176, %v176
  %v193 = vpack.c.b16 %v177, %v177
  %v194 = vpack.c.b16 %v178, %v178
  %v195 = vpack.c.b16 %v179, %v179
  %v196 = vpack.c.b16 %v180, %v180
  %v197 = vpack.c.b16 %v181, %v181
  %214 = vst [vmem:[%s4] sm:$0xf] %v182
  %215 = vst [vmem:[%s4 + $0x4] sm:$0xf] %v183
  %216 = vst [vmem:[%s4 + $0x8] sm:$0xf] %v184
  %217 = vst [vmem:[%s4 + $0xc] sm:$0xf] %v185
  %218 = vst [vmem:[%s4 + $0x10] sm:$0xf] %v186
  %219 = vst [vmem:[%s4 + $0x14] sm:$0xf] %v187
  %220 = vst [vmem:[%s4 + $0x18] sm:$0xf] %v188
  %221 = vst [vmem:[%s4 + $0x1c] sm:$0xf] %v189
  %222 = vst [vmem:[%s4 + $0x20] sm:$0xf] %v190
  %223 = vst [vmem:[%s4 + $0x24] sm:$0xf] %v191
  %224 = vst [vmem:[%s4 + $0x28] sm:$0xf] %v192
  %225 = vst [vmem:[%s4 + $0x2c] sm:$0xf] %v193
  %226 = vst [vmem:[%s4 + $0x30] sm:$0xf] %v194
  %227 = vst [vmem:[%s4 + $0x34] sm:$0xf] %v195
  %228 = vst [vmem:[%s4 + $0x38] sm:$0xf] %v196
  %229 = vst [vmem:[%s4 + $0x3c] sm:$0xf] %v197
  // Predicated region
  $region18: #{gcn_forward.5} parent=0 // pred_check
    _
  $region19: #{gcn_forward.5} parent=0 // pred_check_branch
    %231 = sbr.rel (0) target = $region21
  $region20: #{gcn_forward.5} parent=0 // pred_region
    _
  $region21: #{gcn_forward.5} parent=0 // pred_fallthru
    _
  // Predicated region
  $region22: #{gcn_forward.5} parent=0 // pred_check
    _
  $region23: #{gcn_forward.5} parent=0 // pred_check_branch
    %233 = sbr.rel (0) target = $region25
  $region24: #{gcn_forward.5} parent=0 // pred_region
    _
  $region25: #{gcn_forward.5} parent=0 // pred_fallthru
    _

// kernel: gcn_forward.7
$region0: #{gcn_forward.7}
  #allocation0 [shape = 'u32[]', space=smem, size = 0x4, offset = 0x4, fixed_abs, tag = 'smem constant byte address 0x4 - core index']
  #allocation1 [shape = 'u32[144,128]{1,0:T(1,128)}', space=vmem, size = 0x12000, scoped, tag = 'internal scratch']
  %s0 = inlined_call_operand.vmem [shape: f32[128,128], index: 0, kind: input, shape index: {}]
  %s1 = inlined_call_operand.vmem [shape: f32[1,128], index: 1, kind: input, shape index: {}]
  %s2 = inlined_call_operand.vmem [shape: f32[1,128], index: 2, kind: input, shape index: {}]
  %s3 = inlined_call_operand.vmem [shape: f32[1,128], index: 3, kind: input, shape index: {}]
  %s4 = inlined_call_operand.vmem [shape: f32[128,128], index: 4, kind: output, shape index: {}]
  %s5 = sld [smem:[#allocation0]]
  $region26: #{gcn_forward.7} parent=0
    _
  %s7 = ssub.s32 1, %s5
  %s8 = scalar_select 0, %s7, %s5
  // Predicated region
  $region2: #{gcn_forward.7} parent=0 // pred_check
    _
  $region3: #{gcn_forward.7} parent=0 // pred_check_branch
    %10 = sbr.rel (0) target = $region5
  $region4: #{gcn_forward.7} parent=0 // pred_region
    _
  $region5: #{gcn_forward.7} parent=0 // pred_fallthru
    _
  // Predicated region
  $region6: #{gcn_forward.7} parent=0 // pred_check
    _
  $region7: #{gcn_forward.7} parent=0 // pred_check_branch
    %12 = sbr.rel (0) target = $region9
  $region8: #{gcn_forward.7} parent=0 // pred_region
    _
  $region9: #{gcn_forward.7} parent=0 // pred_fallthru
    _
  // Predicated region
  $region10: #{gcn_forward.7} parent=0 // pred_check
    _
  $region11: #{gcn_forward.7} parent=0 // pred_check_branch
    %14 = sbr.rel (0) target = $region13
  $region12: #{gcn_forward.7} parent=0 // pred_region
    _
  $region13: #{gcn_forward.7} parent=0 // pred_fallthru
    _
  // Predicated region
  $region14: #{gcn_forward.7} parent=0 // pred_check
    _
  $region15: #{gcn_forward.7} parent=0 // pred_check_branch
    %16 = sbr.rel (0) target = $region17
  $region16: #{gcn_forward.7} parent=0 // pred_region
    _
  $region17: #{gcn_forward.7} parent=0 // pred_fallthru
    _
  %v17 = vld [vmem:[%s0] sm:$0xff]
  %v18 = vld [vmem:[%s0 + $0x8] sm:$0xff]
  %v19 = vld [vmem:[%s0 + $0x10] sm:$0xff]
  %v20 = vld [vmem:[%s0 + $0x18] sm:$0xff]
  %v21 = vld [vmem:[%s0 + $0x20] sm:$0xff]
  %v22 = vld [vmem:[%s0 + $0x28] sm:$0xff]
  %v23 = vld [vmem:[%s0 + $0x30] sm:$0xff]
  %v24 = vld [vmem:[%s0 + $0x38] sm:$0xff]
  %v25 = vld [vmem:[%s0 + $0x40] sm:$0xff]
  %v26 = vld [vmem:[%s0 + $0x48] sm:$0xff]
  %v27 = vld [vmem:[%s0 + $0x50] sm:$0xff]
  %v28 = vld [vmem:[%s0 + $0x58] sm:$0xff]
  %v29 = vld [vmem:[%s0 + $0x60] sm:$0xff]
  %v30 = vld [vmem:[%s0 + $0x68] sm:$0xff]
  %v31 = vld [vmem:[%s0 + $0x70] sm:$0xff]
  %v32 = vld [vmem:[%s0 + $0x78] sm:$0xff]
  %v33 = vld [vmem:[%s1] sm:$0x1]
  %v35 = vlaneseq
  %v36 = vshrl.u32 %v35, 7
  %v37 = vsub.s32 0, %v36
  %v38 = vrot.slane %v33, %v37
  %v40 = vmul.f32 %v17, %v38
  %v41 = vmul.f32 %v18, %v38
  %v42 = vmul.f32 %v19, %v38
  %v43 = vmul.f32 %v20, %v38
  %v44 = vmul.f32 %v21, %v38
  %v45 = vmul.f32 %v22, %v38
  %v46 = vmul.f32 %v23, %v38
  %v47 = vmul.f32 %v24, %v38
  %v48 = vmul.f32 %v25, %v38
  %v49 = vmul.f32 %v26, %v38
  %v50 = vmul.f32 %v27, %v38
  %v51 = vmul.f32 %v28, %v38
  %v52 = vmul.f32 %v29, %v38
  %v53 = vmul.f32 %v30, %v38
  %v54 = vmul.f32 %v31, %v38
  %v55 = vmul.f32 %v32, %v38
  %v56 = vld [vmem:[%s2] sm:$0x1]
  %v58 = vlaneseq
  %v59 = vshrl.u32 %v58, 7
  %v60 = vsub.s32 0, %v59
  %v61 = vrot.slane %v56, %v60
  %v63 = vadd.f32 %v40, %v61
  %v64 = vadd.f32 %v41, %v61
  %v65 = vadd.f32 %v42, %v61
  %v66 = vadd.f32 %v43, %v61
  %v67 = vadd.f32 %v44, %v61
  %v68 = vadd.f32 %v45, %v61
  %v69 = vadd.f32 %v46, %v61
  %v70 = vadd.f32 %v47, %v61
  %v71 = vadd.f32 %v48, %v61
  %v72 = vadd.f32 %v49, %v61
  %v73 = vadd.f32 %v50, %v61
  %v74 = vadd.f32 %v51, %v61
  %v75 = vadd.f32 %v52, %v61
  %v76 = vadd.f32 %v53, %v61
  %v77 = vadd.f32 %v54, %v61
  %v78 = vadd.f32 %v55, %v61
  %vm79 = vcmp.gt.f32.partialorder %v63, 0.0
  %vm80 = vcmp.gt.f32.partialorder %v64, 0.0
  %vm81 = vcmp.gt.f32.partialorder %v65, 0.0
  %vm82 = vcmp.gt.f32.partialorder %v66, 0.0
  %vm83 = vcmp.gt.f32.partialorder %v67, 0.0
  %vm84 = vcmp.gt.f32.partialorder %v68, 0.0
  %vm85 = vcmp.gt.f32.partialorder %v69, 0.0
  %vm86 = vcmp.gt.f32.partialorder %v70, 0.0
  %vm87 = vcmp.gt.f32.partialorder %v71, 0.0
  %vm88 = vcmp.gt.f32.partialorder %v72, 0.0
  %vm89 = vcmp.gt.f32.partialorder %v73, 0.0
  %vm90 = vcmp.gt.f32.partialorder %v74, 0.0
  %vm91 = vcmp.gt.f32.partialorder %v75, 0.0
  %vm92 = vcmp.gt.f32.partialorder %v76, 0.0
  %vm93 = vcmp.gt.f32.partialorder %v77, 0.0
  %vm94 = vcmp.gt.f32.partialorder %v78, 0.0
  %v95 = vmul.f32 %v63, 0.1
  %v96 = vmul.f32 %v64, 0.1
  %v97 = vmul.f32 %v65, 0.1
  %v98 = vmul.f32 %v66, 0.1
  %v99 = vmul.f32 %v67, 0.1
  %v100 = vmul.f32 %v68, 0.1
  %v101 = vmul.f32 %v69, 0.1
  %v102 = vmul.f32 %v70, 0.1
  %v103 = vmul.f32 %v71, 0.1
  %v104 = vmul.f32 %v72, 0.1
  %v105 = vmul.f32 %v73, 0.1
  %v106 = vmul.f32 %v74, 0.1
  %v107 = vmul.f32 %v75, 0.1
  %v108 = vmul.f32 %v76, 0.1
  %v109 = vmul.f32 %v77, 0.1
  %v110 = vmul.f32 %v78, 0.1
  %v111 = vsel %vm79, %v63, %v95
  %v112 = vsel %vm80, %v64, %v96
  %v113 = vsel %vm81, %v65, %v97
  %v114 = vsel %vm82, %v66, %v98
  %v115 = vsel %vm83, %v67, %v99
  %v116 = vsel %vm84, %v68, %v100
  %v117 = vsel %vm85, %v69, %v101
  %v118 = vsel %vm86, %v70, %v102
  %v119 = vsel %vm87, %v71, %v103
  %v120 = vsel %vm88, %v72, %v104
  %v121 = vsel %vm89, %v73, %v105
  %v122 = vsel %vm90, %v74, %v106
  %v123 = vsel %vm91, %v75, %v107
  %v124 = vsel %vm92, %v76, %v108
  %v125 = vsel %vm93, %v77, %v109
  %v126 = vsel %vm94, %v78, %v110
  %v127 = vld [vmem:[%s3] sm:$0x1]
  %v129 = vlaneseq
  %v130 = vshrl.u32 %v129, 7
  %v131 = vsub.s32 0, %v130
  %v132 = vrot.slane %v127, %v131
  %v134 = vadd.f32 %v111, %v132
  %v135 = vadd.f32 %v112, %v132
  %v136 = vadd.f32 %v113, %v132
  %v137 = vadd.f32 %v114, %v132
  %v138 = vadd.f32 %v115, %v132
  %v139 = vadd.f32 %v116, %v132
  %v140 = vadd.f32 %v117, %v132
  %v141 = vadd.f32 %v118, %v132
  %v142 = vadd.f32 %v119, %v132
  %v143 = vadd.f32 %v120, %v132
  %v144 = vadd.f32 %v121, %v132
  %v145 = vadd.f32 %v122, %v132
  %v146 = vadd.f32 %v123, %v132
  %v147 = vadd.f32 %v124, %v132
  %v148 = vadd.f32 %v125, %v132
  %v149 = vadd.f32 %v126, %v132
  %150 = vst [vmem:[%s4] sm:$0xff] %v134
  %151 = vst [vmem:[%s4 + $0x8] sm:$0xff] %v135
  %152 = vst [vmem:[%s4 + $0x10] sm:$0xff] %v136
  %153 = vst [vmem:[%s4 + $0x18] sm:$0xff] %v137
  %154 = vst [vmem:[%s4 + $0x20] sm:$0xff] %v138
  %155 = vst [vmem:[%s4 + $0x28] sm:$0xff] %v139
  %156 = vst [vmem:[%s4 + $0x30] sm:$0xff] %v140
  %157 = vst [vmem:[%s4 + $0x38] sm:$0xff] %v141
  %158 = vst [vmem:[%s4 + $0x40] sm:$0xff] %v142
  %159 = vst [vmem:[%s4 + $0x48] sm:$0xff] %v143
  %160 = vst [vmem:[%s4 + $0x50] sm:$0xff] %v144
  %161 = vst [vmem:[%s4 + $0x58] sm:$0xff] %v145
  %162 = vst [vmem:[%s4 + $0x60] sm:$0xff] %v146
  %163 = vst [vmem:[%s4 + $0x68] sm:$0xff] %v147
  %164 = vst [vmem:[%s4 + $0x70] sm:$0xff] %v148
  %165 = vst [vmem:[%s4 + $0x78] sm:$0xff] %v149
  // Predicated region
  $region18: #{gcn_forward.7} parent=0 // pred_check
    _
  $region19: #{gcn_forward.7} parent=0 // pred_check_branch
    %167 = sbr.rel (0) target = $region21
  $region20: #{gcn_forward.7} parent=0 // pred_region
    _
  $region21: #{gcn_forward.7} parent=0 // pred_fallthru
    _
  // Predicated region
  $region22: #{gcn_forward.7} parent=0 // pred_check
    _
  $region23: #{gcn_forward.7} parent=0 // pred_check_branch
    %169 = sbr.rel (0) target = $region25
  $region24: #{gcn_forward.7} parent=0 // pred_region
    _
  $region25: #{gcn_forward.7} parent=0 // pred_fallthru
    _

</llo_original>
